<compile_context>
chip_gen: v5e
topology: v5e:2x2
jax: 0.10.0
libtpu: 0.0.40
codegen_flags: <defaults>
</compile_context>

<pallas_src>
import jax
import jax.numpy as jnp
from jax import lax
from jax.experimental import pallas as pl
from jax.experimental.pallas import tpu as pltpu

NEG_SLOPE = 0.01  # nn.LeakyReLU default
_HP = lax.Precision.HIGHEST

# 4096 rows -> padded [block_b, F] x tile = 4096 * 128 lanes * 4 B = 2 MiB per
# buffer; double-buffered that is 4 MiB, well under the scoped-VMEM default on
# every chip, while still amortizing the ~0.35 us per-grid-step overhead.
_MAX_BLOCK_B = 4096


def mlp_kernel(x_ref, w1_ref, b1_ref, w2_ref, b2_ref, w3_ref, b3_ref, o_ref):
    x = x_ref[...]                                        # [tb, F]

    # Layer 1: Linear(F, 32) + LeakyReLU.
    # Contract F on both operands -> [32, tb]: batch on the 128-lane axis,
    # no in-kernel transpose of x needed.  Bias [32, 1] broadcasts over lanes.
    h = lax.dot_general(
        w1_ref[...], x,
        dimension_numbers=(((1,), (1,)), ((), ())),
        preferred_element_type=jnp.float32,
        precision=_HP,
    ) + b1_ref[...]
    h = jnp.where(h >= 0, h, NEG_SLOPE * h)

    # Layer 2: Linear(32, 8) + LeakyReLU.  [8, 32] @ [32, tb] -> [8, tb]
    h = jnp.dot(w2_ref[...], h, preferred_element_type=jnp.float32,
                precision=_HP) + b2_ref[...]
    h = jnp.where(h >= 0, h, NEG_SLOPE * h)

    # Layer 3: Linear(8, 1) + Sigmoid.  [1, 8] @ [8, tb] -> [1, tb]
    # (lane-dense, unmasked store).  Exact sigmoid; divide is on a tiny tile.
    h = jnp.dot(w3_ref[...], h, preferred_element_type=jnp.float32,
                precision=_HP) + b3_ref[...]
    o_ref[...] = 1.0 / (1.0 + jnp.exp(-h))


def _pick_block_b(batch):
    if batch <= _MAX_BLOCK_B:
        return batch      # single tile: (tb, F) / (1, tb) equal full dims -> legal
    return _MAX_BLOCK_B   # multiple of 8 and 128 -> legal tiled blocks


def mlp_forward(x, params, *, block_b=None):
    """x: [B, F] float32.  params: weights [out, in], biases [out, 1].

    Returns [B, 1] float32 sigmoid output, matching the PyTorch module.
    """
    B, F = x.shape
    if block_b is None:
        block_b = _pick_block_b(B)
    if block_b != B:
        # Tiled path: the block must satisfy the (8, 128) constraint for both
        # the [tb, F] input block (sublanes) and the [1, tb] output block (lanes).
        assert block_b % 128 == 0, "tiled block_b must be a multiple of 128"

    num_tiles = pl.cdiv(B, block_b)
    b_pad = num_tiles * block_b
    if b_pad != B:
        # Tail handling: pad, compute, then drop the pad rows after the call.
        x = jnp.pad(x, ((0, b_pad - B), (0, 0)))

    w1, b1, w2, b2, w3, b3 = (params[k] for k in ("w1", "b1", "w2", "b2", "w3", "b3"))
    H1, H2, H3 = w1.shape[0], w2.shape[0], w3.shape[0]

    full = lambda shape: pl.BlockSpec(shape, lambda i: (0, 0))  # block-resident weights

    out = pl.pallas_call(
        mlp_kernel,
        out_shape=jax.ShapeDtypeStruct((1, b_pad), jnp.float32),
        grid_spec=pltpu.PrefetchScalarGridSpec(
            num_scalar_prefetch=0,
            grid=(num_tiles,),
            in_specs=[
                pl.BlockSpec((block_b, F), lambda i: (i, 0)),
                full((H1, F)), full((H1, 1)),
                full((H2, H1)), full((H2, 1)),
                full((H3, H2)), full((H3, 1)),
            ],
            out_specs=pl.BlockSpec((1, block_b), lambda i: (0, i)),
        ),
        compiler_params=pltpu.CompilerParams(
            dimension_semantics=("parallel",)),
    )(x, w1, b1, w2, b2, w3, b3)

    # [1, b_pad] -> slice pad tail -> [B, 1].  Row-major data order is
    # identical, so the reshape is metadata-only.
    return out[0, :B].reshape(B, 1)


def init_params(key, num_features):
    """Deterministic PyTorch-style (Kaiming-uniform-ish) init, float32.

    Weights are stored PyTorch-style [out, in]; biases as [out, 1].
    """
    ks = jax.random.split(key, 6)

    def linear(kw, kb, fan_in, fan_out):
        bound = 1.0 / jnp.sqrt(fan_in)
        w = jax.random.uniform(kw, (fan_out, fan_in), jnp.float32, -bound, bound)
        b = jax.random.uniform(kb, (fan_out, 1), jnp.float32, -bound, bound)
        return w, b

    w1, b1 = linear(ks[0], ks[1], num_features, 32)
    w2, b2 = linear(ks[2], ks[3], 32, 8)
    w3, b3 = linear(ks[4], ks[5], 8, 1)
    return dict(w1=w1, b1=b1, w2=w2, b2=b2, w3=w3, b3=b3)


def mlp_reference(x, p):
    def lrelu(v):
        return jnp.where(v >= 0, v, NEG_SLOPE * v)
    h = lrelu(jnp.dot(x, p["w1"].T, precision=_HP) + p["b1"].T)
    h = lrelu(jnp.dot(h, p["w2"].T, precision=_HP) + p["b2"].T)
    h = jnp.dot(h, p["w3"].T, precision=_HP) + p["b3"].T
    return jax.nn.sigmoid(h)


if __name__ == "__main__":
    key = jax.random.PRNGKey(0)
    num_features = 16

    kx, kp, kx2 = jax.random.split(key, 3)
    params = init_params(kp, num_features)

    # Exact sigmoid + HIGHEST-precision matmuls in the kernel -> f32-level
    # agreement with the reference.
    TOL = 1e-4

    # 1) Small single-tile smoke test.
    batch = 8
    x = jax.random.normal(kx, (batch, num_features), jnp.float32)
    out = jax.block_until_ready(mlp_forward(x, params))
    ref = mlp_reference(x, params)
    assert out.shape == (batch, 1), out.shape
    err = float(jnp.max(jnp.abs(out - ref)))
    assert err < TOL, f"single-tile max abs err {err}"

    # 2) Tiled + padded path: 5 grid steps of 128 rows (pads 520 -> 640),
    #    exercising the lane-dense [1, block_b] output blocks.
    batch2 = 520
    x2 = jax.random.normal(kx2, (batch2, num_features), jnp.float32)
    out2 = jax.block_until_ready(mlp_forward(x2, params, block_b=128))
    ref2 = mlp_reference(x2, params)
    assert out2.shape == (batch2, 1), out2.shape
    err2 = float(jnp.max(jnp.abs(out2 - ref2)))
    assert err2 < TOL, f"tiled max abs err {err2}"

    print("KERNEL_OK")
</pallas_src>

<mosaic_0001>
module attributes {stable_mosaic.version = 11 : i64} {
  func.func @mlp_kernel(%arg0: i32, %arg1: memref<8x16xf32, #tpu.memory_space<vmem>>, %arg2: memref<32x16xf32, #tpu.memory_space<vmem>>, %arg3: memref<32x1xf32, #tpu.memory_space<vmem>>, %arg4: memref<8x32xf32, #tpu.memory_space<vmem>>, %arg5: memref<8x1xf32, #tpu.memory_space<vmem>>, %arg6: memref<1x8xf32, #tpu.memory_space<vmem>>, %arg7: memref<1x1xf32, #tpu.memory_space<vmem>>, %arg8: memref<1x8xf32, #tpu.memory_space<vmem>>) attributes {dimension_semantics = [#tpu.dimension_semantics<parallel>], iteration_bounds = array<i64: 1>, scalar_prefetch = 0 : i64, scratch_operands = 0 : i64, tpu.core_type = #tpu.core_type<tc>, window_params = [{transform_indices = @transform_0, window_bounds = array<i64: 8, 16>}, {pipeline_mode = #tpu.pipeline_mode<synchronous>, transform_indices = @transform_1, window_bounds = array<i64: 32, 16>}, {pipeline_mode = #tpu.pipeline_mode<synchronous>, transform_indices = @transform_2, window_bounds = array<i64: 32, 1>}, {pipeline_mode = #tpu.pipeline_mode<synchronous>, transform_indices = @transform_3, window_bounds = array<i64: 8, 32>}, {pipeline_mode = #tpu.pipeline_mode<synchronous>, transform_indices = @transform_4, window_bounds = array<i64: 8, 1>}, {pipeline_mode = #tpu.pipeline_mode<synchronous>, transform_indices = @transform_5, window_bounds = array<i64: 1, 8>}, {pipeline_mode = #tpu.pipeline_mode<synchronous>, transform_indices = @transform_6, window_bounds = array<i64: 1, 1>}, {transform_indices = @transform_7, window_bounds = array<i64: 1, 8>}]} {
    %c0 = arith.constant 0 : index
    %c0_0 = arith.constant 0 : index
    %0 = vector.load %arg1[%c0, %c0_0] : memref<8x16xf32, #tpu.memory_space<vmem>>, vector<8x16xf32>
    %c0_1 = arith.constant 0 : index
    %c0_2 = arith.constant 0 : index
    %1 = vector.load %arg2[%c0_1, %c0_2] : memref<32x16xf32, #tpu.memory_space<vmem>>, vector<32x16xf32>
    %cst = arith.constant dense<0.000000e+00> : vector<32x8xf32>
    %2 = tpu.matmul %1, %0, %cst {dimension_numbers = #tpu.dot_dimension_numbers<[1], [1], [0], [0], [0, 0, 1, 0], [], []>, precision = #tpu.contract_precision<fp32>} : vector<32x16xf32>, vector<8x16xf32>, vector<32x8xf32> -> vector<32x8xf32>
    %c0_3 = arith.constant 0 : index
    %c0_4 = arith.constant 0 : index
    %3 = vector.load %arg3[%c0_3, %c0_4] : memref<32x1xf32, #tpu.memory_space<vmem>>, vector<32x1xf32>
    %4 = vector.broadcast %3 : vector<32x1xf32> to vector<32x8xf32>
    %5 = arith.addf %2, %4 : vector<32x8xf32>
    %cst_5 = arith.constant 0.000000e+00 : f32
    %6 = vector.broadcast %cst_5 : f32 to vector<32x8xf32>
    %7 = arith.cmpf oge, %5, %6 : vector<32x8xf32>
    %cst_6 = arith.constant 0.00999999977 : f32
    %8 = vector.broadcast %cst_6 : f32 to vector<32x8xf32>
    %9 = arith.mulf %8, %5 : vector<32x8xf32>
    %10 = arith.select %7, %5, %9 : vector<32x8xi1>, vector<32x8xf32>
    %c0_7 = arith.constant 0 : index
    %c0_8 = arith.constant 0 : index
    %11 = vector.load %arg4[%c0_7, %c0_8] : memref<8x32xf32, #tpu.memory_space<vmem>>, vector<8x32xf32>
    %cst_9 = arith.constant dense<0.000000e+00> : vector<8x8xf32>
    %12 = tpu.matmul %11, %10, %cst_9 {dimension_numbers = #tpu.dot_dimension_numbers<[1], [0], [0], [1], [0, 0, 1, 1], [], []>, precision = #tpu.contract_precision<fp32>} : vector<8x32xf32>, vector<32x8xf32>, vector<8x8xf32> -> vector<8x8xf32>
    %c0_10 = arith.constant 0 : index
    %c0_11 = arith.constant 0 : index
    %13 = vector.load %arg5[%c0_10, %c0_11] : memref<8x1xf32, #tpu.memory_space<vmem>>, vector<8x1xf32>
    %14 = vector.broadcast %13 : vector<8x1xf32> to vector<8x8xf32>
    %15 = arith.addf %12, %14 : vector<8x8xf32>
    %cst_12 = arith.constant 0.000000e+00 : f32
    %16 = vector.broadcast %cst_12 : f32 to vector<8x8xf32>
    %17 = arith.cmpf oge, %15, %16 : vector<8x8xf32>
    %cst_13 = arith.constant 0.00999999977 : f32
    %18 = vector.broadcast %cst_13 : f32 to vector<8x8xf32>
    %19 = arith.mulf %18, %15 : vector<8x8xf32>
    %20 = arith.select %17, %15, %19 : vector<8x8xi1>, vector<8x8xf32>
    %c0_14 = arith.constant 0 : index
    %c0_15 = arith.constant 0 : index
    %21 = vector.load %arg6[%c0_14, %c0_15] : memref<1x8xf32, #tpu.memory_space<vmem>>, vector<1x8xf32>
    %cst_16 = arith.constant dense<0.000000e+00> : vector<1x8xf32>
    %22 = tpu.matmul %21, %20, %cst_16 {dimension_numbers = #tpu.dot_dimension_numbers<[1], [0], [0], [1], [0, 0, 1, 1], [], []>, precision = #tpu.contract_precision<fp32>} : vector<1x8xf32>, vector<8x8xf32>, vector<1x8xf32> -> vector<1x8xf32>
    %c0_17 = arith.constant 0 : index
    %c0_18 = arith.constant 0 : index
    %23 = vector.load %arg7[%c0_17, %c0_18] : memref<1x1xf32, #tpu.memory_space<vmem>>, vector<1x1xf32>
    %24 = vector.broadcast %23 : vector<1x1xf32> to vector<1x8xf32>
    %25 = arith.addf %22, %24 : vector<1x8xf32>
    %cst_19 = arith.constant 0.000000e+00 : f32
    %26 = vector.broadcast %cst_19 : f32 to vector<1x8xf32>
    %27 = arith.subf %26, %25 : vector<1x8xf32>
    %28 = math.exp %27 : vector<1x8xf32>
    %cst_20 = arith.constant 1.000000e+00 : f32
    %29 = vector.broadcast %cst_20 : f32 to vector<1x8xf32>
    %30 = arith.addf %29, %28 : vector<1x8xf32>
    %cst_21 = arith.constant 1.000000e+00 : f32
    %31 = vector.broadcast %cst_21 : f32 to vector<1x8xf32>
    %32 = arith.divf %31, %30 : vector<1x8xf32>
    %c0_22 = arith.constant 0 : index
    %c0_23 = arith.constant 0 : index
    %33 = vector.load %arg8[%c0_22, %c0_23] : memref<1x8xf32, #tpu.memory_space<vmem>>, vector<1x8xf32>
    tpu.vector_store %arg8[%c0_22, %c0_23], %32 {strides = array<i32>} : memref<1x8xf32, #tpu.memory_space<vmem>>, vector<1x8xf32>,
    return
  }
  func.func @transform_0(%arg0: i32) -> (i32, i32) {
    %c0_i32 = arith.constant 0 : i32
    %c0_i32_0 = arith.constant 0 : i32
    return %arg0, %c0_i32 : i32, i32
  }
  func.func @transform_1(%arg0: i32) -> (i32, i32) {
    %c0_i32 = arith.constant 0 : i32
    %c0_i32_0 = arith.constant 0 : i32
    %c0_i32_1 = arith.constant 0 : i32
    return %c0_i32, %c0_i32_0 : i32, i32
  }
  func.func @transform_2(%arg0: i32) -> (i32, i32) {
    %c0_i32 = arith.constant 0 : i32
    %c0_i32_0 = arith.constant 0 : i32
    %c0_i32_1 = arith.constant 0 : i32
    return %c0_i32, %c0_i32_0 : i32, i32
  }
  func.func @transform_3(%arg0: i32) -> (i32, i32) {
    %c0_i32 = arith.constant 0 : i32
    %c0_i32_0 = arith.constant 0 : i32
    %c0_i32_1 = arith.constant 0 : i32
    return %c0_i32, %c0_i32_0 : i32, i32
  }
  func.func @transform_4(%arg0: i32) -> (i32, i32) {
    %c0_i32 = arith.constant 0 : i32
    %c0_i32_0 = arith.constant 0 : i32
    %c0_i32_1 = arith.constant 0 : i32
    return %c0_i32, %c0_i32_0 : i32, i32
  }
  func.func @transform_5(%arg0: i32) -> (i32, i32) {
    %c0_i32 = arith.constant 0 : i32
    %c0_i32_0 = arith.constant 0 : i32
    %c0_i32_1 = arith.constant 0 : i32
    return %c0_i32, %c0_i32_0 : i32, i32
  }
  func.func @transform_6(%arg0: i32) -> (i32, i32) {
    %c0_i32 = arith.constant 0 : i32
    %c0_i32_0 = arith.constant 0 : i32
    %c0_i32_1 = arith.constant 0 : i32
    return %c0_i32, %c0_i32_0 : i32, i32
  }
  func.func @transform_7(%arg0: i32) -> (i32, i32) {
    %c0_i32 = arith.constant 0 : i32
    %c0_i32_0 = arith.constant 0 : i32
    return %c0_i32, %arg0 : i32, i32
  }
}

</mosaic_0001>

<llo_original>
// kernel: tpu_custom_call.1
$region0: #{tpu_custom_call.1}
  #allocation0 [shape = 'u32[]', space=smem, size = 0x4, offset = 0x4, fixed_abs, tag = 'smem constant byte address 0x4 - core index']
  #allocation1 [shape = 'u32[72,128]{1,0:T(1,128)}', space=vmem, size = 0x9000, scoped, tag = 'internal scratch']
  #allocation2 [shape = 'f32[1,1]{1,0:T(1,128)S(1)}', space=vmem, size = 0x200, scoped, tag = 'scoped memory for tpu_custom_call.1']
  %s0 = inlined_call_operand.vmem [shape: f32[8,16], index: 0, kind: input, shape index: {}]
  %s1 = inlined_call_operand.vmem [shape: f32[32,16], index: 1, kind: input, shape index: {}]
  %s2 = inlined_call_operand.vmem [shape: f32[32,1], index: 2, kind: input, shape index: {}]
  %s3 = inlined_call_operand.vmem [shape: f32[8,32], index: 3, kind: input, shape index: {}]
  %s4 = inlined_call_operand.vmem [shape: f32[8,1], index: 4, kind: input, shape index: {}]
  %s5 = inlined_call_operand.vmem [shape: f32[1,8], index: 5, kind: input, shape index: {}]
  %s6 = inlined_call_operand.<no memory space> [shape: f32[1,1], index: 6, kind: input, shape index: {}]
  %s7 = inlined_call_operand.hbm [shape: f32[1,8], index: 7, kind: output, shape index: {}]
  %s8 = sld [smem:[#allocation0]]
  $region38: #{tpu_custom_call.1} parent=0
    _
  %s10 = ssub.s32 1, %s8
  %s11 = scalar_select 0, %s10, %s8
  %v12 = vstv %s6
  %13 = vst [vmem:[#allocation2] sm:$0x1] %v12
  $region1: #{tpu_custom_call.1} parent=0
    #allocation3 [shape = 'u8[512]{0}', space=vmem, size = 0x400, scoped, tag = 'output window, operand 0, single buffered']
    #allocation4 [shape = 's32[1]{0}', space=sflag, size = 0x4, scoped, tag = 'scoped memory for tpu_custom_call.1']
    %14 = vsyncpa [#allocation4], 0
    // Predicated region
    $region2: #{tpu_custom_call.1} parent=1 // pred_check
      _
    $region3: #{tpu_custom_call.1} parent=1 // pred_check_branch
      %16 = sbr.rel (0) target = $region5
    $region4: #{tpu_custom_call.1} parent=1 // pred_region
      _
    $region5: #{tpu_custom_call.1} parent=1 // pred_fallthru
      _
    // Predicated region
    $region6: #{tpu_custom_call.1} parent=1 // pred_check
      _
    $region7: #{tpu_custom_call.1} parent=1 // pred_check_branch
      %18 = sbr.rel (0) target = $region9
    $region8: #{tpu_custom_call.1} parent=1 // pred_region
      _
    $region9: #{tpu_custom_call.1} parent=1 // pred_fallthru
      _
    // Predicated region
    $region10: #{tpu_custom_call.1} parent=1 // pred_check
      _
    $region11: #{tpu_custom_call.1} parent=1 // pred_check_branch
      %20 = sbr.rel (0) target = $region13
    $region12: #{tpu_custom_call.1} parent=1 // pred_region
      _
    $region13: #{tpu_custom_call.1} parent=1 // pred_fallthru
      _
    // Predicated region
    $region14: #{tpu_custom_call.1} parent=1 // pred_check
      _
    $region15: #{tpu_custom_call.1} parent=1 // pred_check_branch
      %22 = sbr.rel (0) target = $region17
    $region16: #{tpu_custom_call.1} parent=1 // pred_region
      _
    $region17: #{tpu_custom_call.1} parent=1 // pred_fallthru
      _
    // Predicated region
    $region18: #{tpu_custom_call.1} parent=1 // pred_check
      _
    $region19: #{tpu_custom_call.1} parent=1 // pred_check_branch
      %24 = sbr.rel (0) target = $region21
    $region20: #{tpu_custom_call.1} parent=1 // pred_region
      _
    $region21: #{tpu_custom_call.1} parent=1 // pred_fallthru
      _
    // Predicated region
    $region22: #{tpu_custom_call.1} parent=1 // pred_check
      _
    $region23: #{tpu_custom_call.1} parent=1 // pred_check_branch
      %26 = sbr.rel (0) target = $region25
    $region24: #{tpu_custom_call.1} parent=1 // pred_region
      _
    $region25: #{tpu_custom_call.1} parent=1 // pred_fallthru
      _
    // Predicated region
    $region26: #{tpu_custom_call.1} parent=1 // pred_check
      _
    $region27: #{tpu_custom_call.1} parent=1 // pred_check_branch
      %28 = sbr.rel (0) target = $region29
    $region28: #{tpu_custom_call.1} parent=1 // pred_region
      _
    $region29: #{tpu_custom_call.1} parent=1 // pred_fallthru
      _
    %v29 = vld [vmem:[%s0] sm:$0xff]
    %v30 = vld [vmem:[%s1] sm:$0xff]
    %v31 = vld [vmem:[%s1 + $0x8] sm:$0xff]
    %v32 = vld [vmem:[%s1 + $0x10] sm:$0xff]
    %v33 = vld [vmem:[%s1 + $0x18] sm:$0xff]
    %v34 = vld [vmem:[%s2] sm:$0xff]
    %v35 = vld [vmem:[%s2 + $0x8] sm:$0xff]
    %v36 = vld [vmem:[%s2 + $0x10] sm:$0xff]
    %v37 = vld [vmem:[%s2 + $0x18] sm:$0xff]
    %39 = vset.pattern.permute.xlu0 0
    %40 = vperm.xlu0 %39, %v34
    %v41 = vpop.permute.xlu0 %40
    %44 = vset.pattern.permute.xlu0 0
    %45 = vperm.xlu0 %44, %v35
    %v46 = vpop.permute.xlu0 %45
    %49 = vset.pattern.permute.xlu0 0
    %50 = vperm.xlu0 %49, %v36
    %v51 = vpop.permute.xlu0 %50
    %54 = vset.pattern.permute.xlu0 0
    %55 = vperm.xlu0 %54, %v37
    %v56 = vpop.permute.xlu0 %55
    %vm58 = vcmask 130048
    %v60 = vsel %vm58, %v30, 0
    %v63 = vsel %vm58, %v31, 0
    %v66 = vsel %vm58, %v32, 0
    %v69 = vsel %vm58, %v33, 0
    %v72 = vsel %vm58, %v29, 0
    %74 = vmatpush.xpose.msra.mxu0 0.0
    %75 = vmatpush.xpose.msra.mxu0 0.0
    %76 = vmatpush.xpose.msra.mxu0 0.0
    %77 = vmatpush.xpose.msra.mxu0 0.0
    %78 = vmatpush.xpose.msra.mxu0 0.0
    %79 = vmatpush.xpose.msra.mxu0 0.0
    %80 = vmatpush.xpose.msra.mxu0 0.0
    %81 = vmatpush.xpose.msra.mxu0 0.0
    %82 = vmatpush.xpose.msra.mxu0 0.0
    %83 = vmatpush.xpose.msra.mxu0 0.0
    %84 = vmatpush.xpose.msra.mxu0 0.0
    %85 = vmatpush.xpose.msra.mxu0 0.0
    %86 = vmatpush.xpose.msra.mxu0 0.0
    %87 = vmatpush.xpose.msra.mxu0 0.0
    %88 = vmatpush.xpose.msra.mxu0 0.0
    %v89 = vand.u32 %v72, 4294901760
    %90 = vmatpush.xpose.msra.mxu0 %v89
    %v91 = vand.u32 %v60, 4294901760
    %v92 = vsub.f32 %v60, %v91
    %v93 = vand.u32 %v92, 4294901760
    %v94 = vsub.f32 %v92, %v93
    %v95 = vand.u32 %v94, 4294901760
    %96 = vmatmul.f32.gmra.mxu0 %v95
    %v97 = vpop.f32.mrf.mxu0
    %v98 = vadd.f32 %v41, %v97
    %v99 = vand.u32 %v63, 4294901760
    %v100 = vsub.f32 %v63, %v99
    %v101 = vand.u32 %v100, 4294901760
    %v102 = vsub.f32 %v100, %v101
    %v103 = vand.u32 %v102, 4294901760
    %104 = vmatmul.f32.gmra.mxu0 %v103
    %v105 = vpop.f32.mrf.mxu0
    %v106 = vadd.f32 %v46, %v105
    %v107 = vand.u32 %v66, 4294901760
    %v108 = vsub.f32 %v66, %v107
    %v109 = vand.u32 %v108, 4294901760
    %v110 = vsub.f32 %v108, %v109
    %v111 = vand.u32 %v110, 4294901760
    %112 = vmatmul.f32.gmra.mxu0 %v111
    %v113 = vpop.f32.mrf.mxu0
    %v114 = vadd.f32 %v51, %v113
    %v115 = vand.u32 %v69, 4294901760
    %v116 = vsub.f32 %v69, %v115
    %v117 = vand.u32 %v116, 4294901760
    %v118 = vsub.f32 %v116, %v117
    %v119 = vand.u32 %v118, 4294901760
    %120 = vmatmul.f32.gmra.mxu0 %v119
    %v121 = vpop.f32.mrf.mxu0
    %v122 = vadd.f32 %v56, %v121
    %123 = vdwg.mxu0
    %124 = vmatpush.xpose.msra.mxu0 0.0
    %125 = vmatpush.xpose.msra.mxu0 0.0
    %126 = vmatpush.xpose.msra.mxu0 0.0
    %127 = vmatpush.xpose.msra.mxu0 0.0
    %128 = vmatpush.xpose.msra.mxu0 0.0
    %129 = vmatpush.xpose.msra.mxu0 0.0
    %130 = vmatpush.xpose.msra.mxu0 0.0
    %131 = vmatpush.xpose.msra.mxu0 0.0
    %132 = vmatpush.xpose.msra.mxu0 0.0
    %133 = vmatpush.xpose.msra.mxu0 0.0
    %134 = vmatpush.xpose.msra.mxu0 0.0
    %135 = vmatpush.xpose.msra.mxu0 0.0
    %136 = vmatpush.xpose.msra.mxu0 0.0
    %137 = vmatpush.xpose.msra.mxu0 0.0
    %138 = vmatpush.xpose.msra.mxu0 0.0
    %v139 = vand.u32 %v72, 4294901760
    %v140 = vsub.f32 %v72, %v139
    %v141 = vand.u32 %v140, 4294901760
    %v142 = vsub.f32 %v140, %v141
    %v143 = vand.u32 %v142, 4294901760
    %144 = vmatpush.xpose.msra.mxu0 %v143
    %v145 = vand.u32 %v60, 4294901760
    %146 = vmatmul.f32.gmra.mxu0 %v145
    %v147 = vpop.f32.mrf.mxu0
    %v148 = vadd.f32 %v98, %v147
    %v149 = vand.u32 %v63, 4294901760
    %150 = vmatmul.f32.gmra.mxu0 %v149
    %v151 = vpop.f32.mrf.mxu0
    %v152 = vadd.f32 %v106, %v151
    %v153 = vand.u32 %v66, 4294901760
    %154 = vmatmul.f32.gmra.mxu0 %v153
    %v155 = vpop.f32.mrf.mxu0
    %v156 = vadd.f32 %v114, %v155
    %v157 = vand.u32 %v69, 4294901760
    %158 = vmatmul.f32.gmra.mxu0 %v157
    %v159 = vpop.f32.mrf.mxu0
    %v160 = vadd.f32 %v122, %v159
    %161 = vdwg.mxu0
    %162 = vmatpush.xpose.msra.mxu0 0.0
    %163 = vmatpush.xpose.msra.mxu0 0.0
    %164 = vmatpush.xpose.msra.mxu0 0.0
    %165 = vmatpush.xpose.msra.mxu0 0.0
    %166 = vmatpush.xpose.msra.mxu0 0.0
    %167 = vmatpush.xpose.msra.mxu0 0.0
    %168 = vmatpush.xpose.msra.mxu0 0.0
    %169 = vmatpush.xpose.msra.mxu0 0.0
    %170 = vmatpush.xpose.msra.mxu0 0.0
    %171 = vmatpush.xpose.msra.mxu0 0.0
    %172 = vmatpush.xpose.msra.mxu0 0.0
    %173 = vmatpush.xpose.msra.mxu0 0.0
    %174 = vmatpush.xpose.msra.mxu0 0.0
    %175 = vmatpush.xpose.msra.mxu0 0.0
    %176 = vmatpush.xpose.msra.mxu0 0.0
    %v177 = vand.u32 %v72, 4294901760
    %v178 = vsub.f32 %v72, %v177
    %179 = vmatpush.xpose.msra.mxu0 %v178
    %v180 = vand.u32 %v60, 4294901760
    %v181 = vsub.f32 %v60, %v180
    %182 = vmatmul.f32.gmra.mxu0 %v181
    %v183 = vpop.f32.mrf.mxu0
    %v184 = vadd.f32 %v148, %v183
    %v185 = vand.u32 %v63, 4294901760
    %v186 = vsub.f32 %v63, %v185
    %187 = vmatmul.f32.gmra.mxu0 %v186
    %v188 = vpop.f32.mrf.mxu0
    %v189 = vadd.f32 %v152, %v188
    %v190 = vand.u32 %v66, 4294901760
    %v191 = vsub.f32 %v66, %v190
    %192 = vmatmul.f32.gmra.mxu0 %v191
    %v193 = vpop.f32.mrf.mxu0
    %v194 = vadd.f32 %v156, %v193
    %v195 = vand.u32 %v69, 4294901760
    %v196 = vsub.f32 %v69, %v195
    %197 = vmatmul.f32.gmra.mxu0 %v196
    %v198 = vpop.f32.mrf.mxu0
    %v199 = vadd.f32 %v160, %v198
    %200 = vdwg.mxu0
    %201 = vmatpush.xpose.msra.mxu0 0.0
    %202 = vmatpush.xpose.msra.mxu0 0.0
    %203 = vmatpush.xpose.msra.mxu0 0.0
    %204 = vmatpush.xpose.msra.mxu0 0.0
    %205 = vmatpush.xpose.msra.mxu0 0.0
    %206 = vmatpush.xpose.msra.mxu0 0.0
    %207 = vmatpush.xpose.msra.mxu0 0.0
    %208 = vmatpush.xpose.msra.mxu0 0.0
    %209 = vmatpush.xpose.msra.mxu0 0.0
    %210 = vmatpush.xpose.msra.mxu0 0.0
    %211 = vmatpush.xpose.msra.mxu0 0.0
    %212 = vmatpush.xpose.msra.mxu0 0.0
    %213 = vmatpush.xpose.msra.mxu0 0.0
    %214 = vmatpush.xpose.msra.mxu0 0.0
    %215 = vmatpush.xpose.msra.mxu0 0.0
    %v216 = vand.u32 %v72, 4294901760
    %217 = vmatpush.xpose.msra.mxu0 %v216
    %v218 = vand.u32 %v60, 4294901760
    %v219 = vsub.f32 %v60, %v218
    %v220 = vand.u32 %v219, 4294901760
    %221 = vmatmul.f32.gmra.mxu0 %v220
    %v222 = vpop.f32.mrf.mxu0
    %v223 = vadd.f32 %v184, %v222
    %v224 = vand.u32 %v63, 4294901760
    %v225 = vsub.f32 %v63, %v224
    %v226 = vand.u32 %v225, 4294901760
    %227 = vmatmul.f32.gmra.mxu0 %v226
    %v228 = vpop.f32.mrf.mxu0
    %v229 = vadd.f32 %v189, %v228
    %v230 = vand.u32 %v66, 4294901760
    %v231 = vsub.f32 %v66, %v230
    %v232 = vand.u32 %v231, 4294901760
    %233 = vmatmul.f32.gmra.mxu0 %v232
    %v234 = vpop.f32.mrf.mxu0
    %v235 = vadd.f32 %v194, %v234
    %v236 = vand.u32 %v69, 4294901760
    %v237 = vsub.f32 %v69, %v236
    %v238 = vand.u32 %v237, 4294901760
    %239 = vmatmul.f32.gmra.mxu0 %v238
    %v240 = vpop.f32.mrf.mxu0
    %v241 = vadd.f32 %v199, %v240
    %242 = vdwg.mxu0
    %243 = vmatpush.xpose.msra.mxu0 0.0
    %244 = vmatpush.xpose.msra.mxu0 0.0
    %245 = vmatpush.xpose.msra.mxu0 0.0
    %246 = vmatpush.xpose.msra.mxu0 0.0
    %247 = vmatpush.xpose.msra.mxu0 0.0
    %248 = vmatpush.xpose.msra.mxu0 0.0
    %249 = vmatpush.xpose.msra.mxu0 0.0
    %250 = vmatpush.xpose.msra.mxu0 0.0
    %251 = vmatpush.xpose.msra.mxu0 0.0
    %252 = vmatpush.xpose.msra.mxu0 0.0
    %253 = vmatpush.xpose.msra.mxu0 0.0
    %254 = vmatpush.xpose.msra.mxu0 0.0
    %255 = vmatpush.xpose.msra.mxu0 0.0
    %256 = vmatpush.xpose.msra.mxu0 0.0
    %257 = vmatpush.xpose.msra.mxu0 0.0
    %v258 = vand.u32 %v72, 4294901760
    %v259 = vsub.f32 %v72, %v258
    %v260 = vand.u32 %v259, 4294901760
    %261 = vmatpush.xpose.msra.mxu0 %v260
    %v262 = vand.u32 %v60, 4294901760
    %263 = vmatmul.f32.gmra.mxu0 %v262
    %v264 = vpop.f32.mrf.mxu0
    %v265 = vadd.f32 %v223, %v264
    %v266 = vand.u32 %v63, 4294901760
    %267 = vmatmul.f32.gmra.mxu0 %v266
    %v268 = vpop.f32.mrf.mxu0
    %v269 = vadd.f32 %v229, %v268
    %v270 = vand.u32 %v66, 4294901760
    %271 = vmatmul.f32.gmra.mxu0 %v270
    %v272 = vpop.f32.mrf.mxu0
    %v273 = vadd.f32 %v235, %v272
    %v274 = vand.u32 %v69, 4294901760
    %275 = vmatmul.f32.gmra.mxu0 %v274
    %v276 = vpop.f32.mrf.mxu0
    %v277 = vadd.f32 %v241, %v276
    %278 = vdwg.mxu0
    %279 = vmatpush.xpose.msra.mxu0 0.0
    %280 = vmatpush.xpose.msra.mxu0 0.0
    %281 = vmatpush.xpose.msra.mxu0 0.0
    %282 = vmatpush.xpose.msra.mxu0 0.0
    %283 = vmatpush.xpose.msra.mxu0 0.0
    %284 = vmatpush.xpose.msra.mxu0 0.0
    %285 = vmatpush.xpose.msra.mxu0 0.0
    %286 = vmatpush.xpose.msra.mxu0 0.0
    %287 = vmatpush.xpose.msra.mxu0 0.0
    %288 = vmatpush.xpose.msra.mxu0 0.0
    %289 = vmatpush.xpose.msra.mxu0 0.0
    %290 = vmatpush.xpose.msra.mxu0 0.0
    %291 = vmatpush.xpose.msra.mxu0 0.0
    %292 = vmatpush.xpose.msra.mxu0 0.0
    %293 = vmatpush.xpose.msra.mxu0 0.0
    %v294 = vand.u32 %v72, 4294901760
    %295 = vmatpush.xpose.msra.mxu0 %v294
    %v296 = vand.u32 %v60, 4294901760
    %297 = vmatmul.f32.gmra.mxu0 %v296
    %v298 = vpop.f32.mrf.mxu0
    %v299 = vadd.f32 %v265, %v298
    %v300 = vand.u32 %v63, 4294901760
    %301 = vmatmul.f32.gmra.mxu0 %v300
    %v302 = vpop.f32.mrf.mxu0
    %v303 = vadd.f32 %v269, %v302
    %v304 = vand.u32 %v66, 4294901760
    %305 = vmatmul.f32.gmra.mxu0 %v304
    %v306 = vpop.f32.mrf.mxu0
    %v307 = vadd.f32 %v273, %v306
    %v308 = vand.u32 %v69, 4294901760
    %309 = vmatmul.f32.gmra.mxu0 %v308
    %v310 = vpop.f32.mrf.mxu0
    %v311 = vadd.f32 %v277, %v310
    %312 = vdwg.mxu0
    %vm313 = vcmp.ge.f32.partialorder %v299, 0.0
    %vm314 = vcmp.ge.f32.partialorder %v303, 0.0
    %vm315 = vcmp.ge.f32.partialorder %v307, 0.0
    %vm316 = vcmp.ge.f32.partialorder %v311, 0.0
    %v317 = vmul.f32 %v299, 0.01
    %v318 = vmul.f32 %v303, 0.01
    %v319 = vmul.f32 %v307, 0.01
    %v320 = vmul.f32 %v311, 0.01
    %v321 = vsel %vm313, %v299, %v317
    %v322 = vsel %vm314, %v303, %v318
    %v323 = vsel %vm315, %v307, %v319
    %v324 = vsel %vm316, %v311, %v320
    %v325 = vld [vmem:[%s3] sm:$0xff]
    %v326 = vld [vmem:[%s4] sm:$0xff]
    %328 = vset.pattern.permute.xlu0 0
    %329 = vperm.xlu0 %328, %v326
    %v330 = vpop.permute.xlu0 %329
    %vm332 = vcmask 261120
    %v334 = vsel %vm332, %v325, 0
    %336 = vmatpush.msra.mxu0 0.0
    %337 = vmatpush.msra.mxu0 0.0
    %338 = vmatpush.msra.mxu0 0.0
    %339 = vmatpush.msra.mxu0 0.0
    %340 = vmatpush.msra.mxu0 0.0
    %341 = vmatpush.msra.mxu0 0.0
    %342 = vmatpush.msra.mxu0 0.0
    %343 = vmatpush.msra.mxu0 0.0
    %344 = vmatpush.msra.mxu0 0.0
    %345 = vmatpush.msra.mxu0 0.0
    %346 = vmatpush.msra.mxu0 0.0
    %347 = vmatpush.msra.mxu0 0.0
    %v348 = vand.u32 %v324, 4294901760
    %349 = vmatpush.msra.mxu0 %v348
    %v350 = vand.u32 %v323, 4294901760
    %351 = vmatpush.msra.mxu0 %v350
    %v352 = vand.u32 %v322, 4294901760
    %353 = vmatpush.msra.mxu0 %v352
    %v354 = vand.u32 %v321, 4294901760
    %355 = vmatpush.msra.mxu0 %v354
    %v356 = vand.u32 %v334, 4294901760
    %v357 = vsub.f32 %v334, %v356
    %v358 = vand.u32 %v357, 4294901760
    %v359 = vsub.f32 %v357, %v358
    %v360 = vand.u32 %v359, 4294901760
    %361 = vmatmul.f32.gmra.mxu0 %v360
    %v362 = vpop.f32.mrf.mxu0
    %v363 = vadd.f32 %v330, %v362
    %364 = vdwg.mxu0
    %365 = vmatpush.msra.mxu0 0.0
    %366 = vmatpush.msra.mxu0 0.0
    %367 = vmatpush.msra.mxu0 0.0
    %368 = vmatpush.msra.mxu0 0.0
    %369 = vmatpush.msra.mxu0 0.0
    %370 = vmatpush.msra.mxu0 0.0
    %371 = vmatpush.msra.mxu0 0.0
    %372 = vmatpush.msra.mxu0 0.0
    %373 = vmatpush.msra.mxu0 0.0
    %374 = vmatpush.msra.mxu0 0.0
    %375 = vmatpush.msra.mxu0 0.0
    %376 = vmatpush.msra.mxu0 0.0
    %v377 = vand.u32 %v324, 4294901760
    %v378 = vsub.f32 %v324, %v377
    %v379 = vand.u32 %v378, 4294901760
    %v380 = vsub.f32 %v378, %v379
    %v381 = vand.u32 %v380, 4294901760
    %382 = vmatpush.msra.mxu0 %v381
    %v383 = vand.u32 %v323, 4294901760
    %v384 = vsub.f32 %v323, %v383
    %v385 = vand.u32 %v384, 4294901760
    %v386 = vsub.f32 %v384, %v385
    %v387 = vand.u32 %v386, 4294901760
    %388 = vmatpush.msra.mxu0 %v387
    %v389 = vand.u32 %v322, 4294901760
    %v390 = vsub.f32 %v322, %v389
    %v391 = vand.u32 %v390, 4294901760
    %v392 = vsub.f32 %v390, %v391
    %v393 = vand.u32 %v392, 4294901760
    %394 = vmatpush.msra.mxu0 %v393
    %v395 = vand.u32 %v321, 4294901760
    %v396 = vsub.f32 %v321, %v395
    %v397 = vand.u32 %v396, 4294901760
    %v398 = vsub.f32 %v396, %v397
    %v399 = vand.u32 %v398, 4294901760
    %400 = vmatpush.msra.mxu0 %v399
    %v401 = vand.u32 %v334, 4294901760
    %402 = vmatmul.f32.gmra.mxu0 %v401
    %v403 = vpop.f32.mrf.mxu0
    %v404 = vadd.f32 %v363, %v403
    %405 = vdwg.mxu0
    %406 = vmatpush.msra.mxu0 0.0
    %407 = vmatpush.msra.mxu0 0.0
    %408 = vmatpush.msra.mxu0 0.0
    %409 = vmatpush.msra.mxu0 0.0
    %410 = vmatpush.msra.mxu0 0.0
    %411 = vmatpush.msra.mxu0 0.0
    %412 = vmatpush.msra.mxu0 0.0
    %413 = vmatpush.msra.mxu0 0.0
    %414 = vmatpush.msra.mxu0 0.0
    %415 = vmatpush.msra.mxu0 0.0
    %416 = vmatpush.msra.mxu0 0.0
    %417 = vmatpush.msra.mxu0 0.0
    %v418 = vand.u32 %v324, 4294901760
    %v419 = vsub.f32 %v324, %v418
    %420 = vmatpush.msra.mxu0 %v419
    %v421 = vand.u32 %v323, 4294901760
    %v422 = vsub.f32 %v323, %v421
    %423 = vmatpush.msra.mxu0 %v422
    %v424 = vand.u32 %v322, 4294901760
    %v425 = vsub.f32 %v322, %v424
    %426 = vmatpush.msra.mxu0 %v425
    %v427 = vand.u32 %v321, 4294901760
    %v428 = vsub.f32 %v321, %v427
    %429 = vmatpush.msra.mxu0 %v428
    %v430 = vand.u32 %v334, 4294901760
    %v431 = vsub.f32 %v334, %v430
    %432 = vmatmul.f32.gmra.mxu0 %v431
    %v433 = vpop.f32.mrf.mxu0
    %v434 = vadd.f32 %v404, %v433
    %435 = vdwg.mxu0
    %436 = vmatpush.msra.mxu0 0.0
    %437 = vmatpush.msra.mxu0 0.0
    %438 = vmatpush.msra.mxu0 0.0
    %439 = vmatpush.msra.mxu0 0.0
    %440 = vmatpush.msra.mxu0 0.0
    %441 = vmatpush.msra.mxu0 0.0
    %442 = vmatpush.msra.mxu0 0.0
    %443 = vmatpush.msra.mxu0 0.0
    %444 = vmatpush.msra.mxu0 0.0
    %445 = vmatpush.msra.mxu0 0.0
    %446 = vmatpush.msra.mxu0 0.0
    %447 = vmatpush.msra.mxu0 0.0
    %v448 = vand.u32 %v324, 4294901760
    %449 = vmatpush.msra.mxu0 %v448
    %v450 = vand.u32 %v323, 4294901760
    %451 = vmatpush.msra.mxu0 %v450
    %v452 = vand.u32 %v322, 4294901760
    %453 = vmatpush.msra.mxu0 %v452
    %v454 = vand.u32 %v321, 4294901760
    %455 = vmatpush.msra.mxu0 %v454
    %v456 = vand.u32 %v334, 4294901760
    %v457 = vsub.f32 %v334, %v456
    %v458 = vand.u32 %v457, 4294901760
    %459 = vmatmul.f32.gmra.mxu0 %v458
    %v460 = vpop.f32.mrf.mxu0
    %v461 = vadd.f32 %v434, %v460
    %462 = vdwg.mxu0
    %463 = vmatpush.msra.mxu0 0.0
    %464 = vmatpush.msra.mxu0 0.0
    %465 = vmatpush.msra.mxu0 0.0
    %466 = vmatpush.msra.mxu0 0.0
    %467 = vmatpush.msra.mxu0 0.0
    %468 = vmatpush.msra.mxu0 0.0
    %469 = vmatpush.msra.mxu0 0.0
    %470 = vmatpush.msra.mxu0 0.0
    %471 = vmatpush.msra.mxu0 0.0
    %472 = vmatpush.msra.mxu0 0.0
    %473 = vmatpush.msra.mxu0 0.0
    %474 = vmatpush.msra.mxu0 0.0
    %v475 = vand.u32 %v324, 4294901760
    %v476 = vsub.f32 %v324, %v475
    %v477 = vand.u32 %v476, 4294901760
    %478 = vmatpush.msra.mxu0 %v477
    %v479 = vand.u32 %v323, 4294901760
    %v480 = vsub.f32 %v323, %v479
    %v481 = vand.u32 %v480, 4294901760
    %482 = vmatpush.msra.mxu0 %v481
    %v483 = vand.u32 %v322, 4294901760
    %v484 = vsub.f32 %v322, %v483
    %v485 = vand.u32 %v484, 4294901760
    %486 = vmatpush.msra.mxu0 %v485
    %v487 = vand.u32 %v321, 4294901760
    %v488 = vsub.f32 %v321, %v487
    %v489 = vand.u32 %v488, 4294901760
    %490 = vmatpush.msra.mxu0 %v489
    %v491 = vand.u32 %v334, 4294901760
    %492 = vmatmul.f32.gmra.mxu0 %v491
    %v493 = vpop.f32.mrf.mxu0
    %v494 = vadd.f32 %v461, %v493
    %495 = vdwg.mxu0
    %496 = vmatpush.msra.mxu0 0.0
    %497 = vmatpush.msra.mxu0 0.0
    %498 = vmatpush.msra.mxu0 0.0
    %499 = vmatpush.msra.mxu0 0.0
    %500 = vmatpush.msra.mxu0 0.0
    %501 = vmatpush.msra.mxu0 0.0
    %502 = vmatpush.msra.mxu0 0.0
    %503 = vmatpush.msra.mxu0 0.0
    %504 = vmatpush.msra.mxu0 0.0
    %505 = vmatpush.msra.mxu0 0.0
    %506 = vmatpush.msra.mxu0 0.0
    %507 = vmatpush.msra.mxu0 0.0
    %v508 = vand.u32 %v324, 4294901760
    %509 = vmatpush.msra.mxu0 %v508
    %v510 = vand.u32 %v323, 4294901760
    %511 = vmatpush.msra.mxu0 %v510
    %v512 = vand.u32 %v322, 4294901760
    %513 = vmatpush.msra.mxu0 %v512
    %v514 = vand.u32 %v321, 4294901760
    %515 = vmatpush.msra.mxu0 %v514
    %v516 = vand.u32 %v334, 4294901760
    %517 = vmatmul.f32.gmra.mxu0 %v516
    %v518 = vpop.f32.mrf.mxu0
    %v519 = vadd.f32 %v494, %v518
    %520 = vdwg.mxu0
    %vm521 = vcmp.ge.f32.partialorder %v519, 0.0
    %v522 = vmul.f32 %v519, 0.01
    %v523 = vsel %vm521, %v519, %v522
    %v524 = vld [vmem:[%s5] sm:$0x1]
    %v525 = vld [vmem:[#allocation2] sm:$0x1]
    %527 = vset.pattern.permute.xlu0 0
    %528 = vperm.xlu0 %527, %v525
    %v529 = vpop.permute.xlu0 %528
    %v531 = vperm.slane %v529, 0
    %vm532 = vcmask 64512
    %v534 = vsel %vm532, %v524, 0
    %536 = vmatpush.msra.mxu0 0.0
    %537 = vmatpush.msra.mxu0 0.0
    %538 = vmatpush.msra.mxu0 0.0
    %539 = vmatpush.msra.mxu0 0.0
    %540 = vmatpush.msra.mxu0 0.0
    %541 = vmatpush.msra.mxu0 0.0
    %542 = vmatpush.msra.mxu0 0.0
    %543 = vmatpush.msra.mxu0 0.0
    %544 = vmatpush.msra.mxu0 0.0
    %545 = vmatpush.msra.mxu0 0.0
    %546 = vmatpush.msra.mxu0 0.0
    %547 = vmatpush.msra.mxu0 0.0
    %548 = vmatpush.msra.mxu0 0.0
    %549 = vmatpush.msra.mxu0 0.0
    %550 = vmatpush.msra.mxu0 0.0
    %v551 = vand.u32 %v523, 4294901760
    %552 = vmatpush.msra.mxu0 %v551
    %v553 = vand.u32 %v534, 4294901760
    %v554 = vsub.f32 %v534, %v553
    %v555 = vand.u32 %v554, 4294901760
    %v556 = vsub.f32 %v554, %v555
    %v557 = vand.u32 %v556, 4294901760
    %558 = vmatmul.f32.gmra.mxu0 %v557
    %v559 = vpop.f32.mrf.mxu0
    %v560 = vadd.f32 %v531, %v559
    %561 = vdwg.mxu0
    %562 = vmatpush.msra.mxu0 0.0
    %563 = vmatpush.msra.mxu0 0.0
    %564 = vmatpush.msra.mxu0 0.0
    %565 = vmatpush.msra.mxu0 0.0
    %566 = vmatpush.msra.mxu0 0.0
    %567 = vmatpush.msra.mxu0 0.0
    %568 = vmatpush.msra.mxu0 0.0
    %569 = vmatpush.msra.mxu0 0.0
    %570 = vmatpush.msra.mxu0 0.0
    %571 = vmatpush.msra.mxu0 0.0
    %572 = vmatpush.msra.mxu0 0.0
    %573 = vmatpush.msra.mxu0 0.0
    %574 = vmatpush.msra.mxu0 0.0
    %575 = vmatpush.msra.mxu0 0.0
    %576 = vmatpush.msra.mxu0 0.0
    %v577 = vand.u32 %v523, 4294901760
    %v578 = vsub.f32 %v523, %v577
    %v579 = vand.u32 %v578, 4294901760
    %v580 = vsub.f32 %v578, %v579
    %v581 = vand.u32 %v580, 4294901760
    %582 = vmatpush.msra.mxu0 %v581
    %v583 = vand.u32 %v534, 4294901760
    %584 = vmatmul.f32.gmra.mxu0 %v583
    %v585 = vpop.f32.mrf.mxu0
    %v586 = vadd.f32 %v560, %v585
    %587 = vdwg.mxu0
    %588 = vmatpush.msra.mxu0 0.0
    %589 = vmatpush.msra.mxu0 0.0
    %590 = vmatpush.msra.mxu0 0.0
    %591 = vmatpush.msra.mxu0 0.0
    %592 = vmatpush.msra.mxu0 0.0
    %593 = vmatpush.msra.mxu0 0.0
    %594 = vmatpush.msra.mxu0 0.0
    %595 = vmatpush.msra.mxu0 0.0
    %596 = vmatpush.msra.mxu0 0.0
    %597 = vmatpush.msra.mxu0 0.0
    %598 = vmatpush.msra.mxu0 0.0
    %599 = vmatpush.msra.mxu0 0.0
    %600 = vmatpush.msra.mxu0 0.0
    %601 = vmatpush.msra.mxu0 0.0
    %602 = vmatpush.msra.mxu0 0.0
    %v603 = vand.u32 %v523, 4294901760
    %v604 = vsub.f32 %v523, %v603
    %605 = vmatpush.msra.mxu0 %v604
    %v606 = vand.u32 %v534, 4294901760
    %v607 = vsub.f32 %v534, %v606
    %608 = vmatmul.f32.gmra.mxu0 %v607
    %v609 = vpop.f32.mrf.mxu0
    %v610 = vadd.f32 %v586, %v609
    %611 = vdwg.mxu0
    %612 = vmatpush.msra.mxu0 0.0
    %613 = vmatpush.msra.mxu0 0.0
    %614 = vmatpush.msra.mxu0 0.0
    %615 = vmatpush.msra.mxu0 0.0
    %616 = vmatpush.msra.mxu0 0.0
    %617 = vmatpush.msra.mxu0 0.0
    %618 = vmatpush.msra.mxu0 0.0
    %619 = vmatpush.msra.mxu0 0.0
    %620 = vmatpush.msra.mxu0 0.0
    %621 = vmatpush.msra.mxu0 0.0
    %622 = vmatpush.msra.mxu0 0.0
    %623 = vmatpush.msra.mxu0 0.0
    %624 = vmatpush.msra.mxu0 0.0
    %625 = vmatpush.msra.mxu0 0.0
    %626 = vmatpush.msra.mxu0 0.0
    %v627 = vand.u32 %v523, 4294901760
    %628 = vmatpush.msra.mxu0 %v627
    %v629 = vand.u32 %v534, 4294901760
    %v630 = vsub.f32 %v534, %v629
    %v631 = vand.u32 %v630, 4294901760
    %632 = vmatmul.f32.gmra.mxu0 %v631
    %v633 = vpop.f32.mrf.mxu0
    %v634 = vadd.f32 %v610, %v633
    %635 = vdwg.mxu0
    %636 = vmatpush.msra.mxu0 0.0
    %637 = vmatpush.msra.mxu0 0.0
    %638 = vmatpush.msra.mxu0 0.0
    %639 = vmatpush.msra.mxu0 0.0
    %640 = vmatpush.msra.mxu0 0.0
    %641 = vmatpush.msra.mxu0 0.0
    %642 = vmatpush.msra.mxu0 0.0
    %643 = vmatpush.msra.mxu0 0.0
    %644 = vmatpush.msra.mxu0 0.0
    %645 = vmatpush.msra.mxu0 0.0
    %646 = vmatpush.msra.mxu0 0.0
    %647 = vmatpush.msra.mxu0 0.0
    %648 = vmatpush.msra.mxu0 0.0
    %649 = vmatpush.msra.mxu0 0.0
    %650 = vmatpush.msra.mxu0 0.0
    %v651 = vand.u32 %v523, 4294901760
    %v652 = vsub.f32 %v523, %v651
    %v653 = vand.u32 %v652, 4294901760
    %654 = vmatpush.msra.mxu0 %v653
    %v655 = vand.u32 %v534, 4294901760
    %656 = vmatmul.f32.gmra.mxu0 %v655
    %v657 = vpop.f32.mrf.mxu0
    %v658 = vadd.f32 %v634, %v657
    %659 = vdwg.mxu0
    %660 = vmatpush.msra.mxu0 0.0
    %661 = vmatpush.msra.mxu0 0.0
    %662 = vmatpush.msra.mxu0 0.0
    %663 = vmatpush.msra.mxu0 0.0
    %664 = vmatpush.msra.mxu0 0.0
    %665 = vmatpush.msra.mxu0 0.0
    %666 = vmatpush.msra.mxu0 0.0
    %667 = vmatpush.msra.mxu0 0.0
    %668 = vmatpush.msra.mxu0 0.0
    %669 = vmatpush.msra.mxu0 0.0
    %670 = vmatpush.msra.mxu0 0.0
    %671 = vmatpush.msra.mxu0 0.0
    %672 = vmatpush.msra.mxu0 0.0
    %673 = vmatpush.msra.mxu0 0.0
    %674 = vmatpush.msra.mxu0 0.0
    %v675 = vand.u32 %v523, 4294901760
    %676 = vmatpush.msra.mxu0 %v675
    %v677 = vand.u32 %v534, 4294901760
    %678 = vmatmul.f32.gmra.mxu0 %v677
    %v679 = vpop.f32.mrf.mxu0
    %v680 = vadd.f32 %v658, %v679
    %681 = vdwg.mxu0
    %v682 = vsub.f32 0.0, %v680
    %v683 = vmul.f32 %v682, 1.442695
    %v684 = vpow.pop %v683
    %v685 = vadd.f32 %v684, 1.0
    %v686 = vrcp.pop %v685
    %v687 = vmul.f32 %v685, %v686
    %v688 = vsub.f32 1.0, %v687
    %v689 = vmul.f32 %v686, %v688
    %v690 = vadd.f32 %v686, %v689
    %vm691 = vweird.f32 %v685
    %vm692 = vweird.f32 %v686
    %vm693 = vmor %vm691, %vm692
    %v694 = vsel %vm693, %v686, %v690
    %v695 = vand.u32 2147483647, %v685
    %vm696 = vcmp.eq.f32.partialorder %v695, 8.507059e+37
    %v697 = vand.u32 %v685, 2147483648
    %v698 = vor.u32 1.1754944e-38, %v697
    %v699 = vsel %vm696, %v698, %v694
    %v700 = vmul.f32 1.0, %v699
    %vm701 = vcmask 57344
    %702 = vst.msk [vmem:[#allocation3] sm:$0x1] %vm701, %v700
    // Predicated region
    $region30: #{tpu_custom_call.1} parent=1 // pred_check
      _
    $region31: #{tpu_custom_call.1} parent=1 // pred_check_branch
      %704 = sbr.rel (0) target = $region33
    $region32: #{tpu_custom_call.1} parent=1 // pred_region
      %706 = vsyncadd [#allocation4], 0
      %s708 = sshll.u32 [#allocation3], 4
      %s709 = int_to_ptr.vmem [resolvable:$true] %s708
      %s710 = sshll.u32 %s7, 4
      %s711 = int_to_ptr.hbm [resolvable:$true] %s710
      %713 = dma.vmem_to_hbm [thread:$0]  %s709, 16, %s711, [#allocation4]
    $region33: #{tpu_custom_call.1} parent=1 // pred_fallthru
      _
    // Predicated region
    $region34: #{tpu_custom_call.1} parent=1 // pred_check
      _
    $region35: #{tpu_custom_call.1} parent=1 // pred_check_branch
      %715 = sbr.rel (0) target = $region37
    $region36: #{tpu_custom_call.1} parent=1 // pred_region
      %717 = dma.done [#allocation4], 16
    $region37: #{tpu_custom_call.1} parent=1 // pred_fallthru
      _
    %718 = vsyncpa [#allocation4], 1

</llo_original>
